<compile_context>
chip_gen: v7x
topology: tpu7x:2x2x1
jax: 0.10.0
libtpu: 0.0.40
codegen_flags: <defaults>
</compile_context>

<pallas_src>
import functools
import math

import jax
import jax.numpy as jnp
from jax import lax
from jax.experimental import pallas as pl
from jax.experimental.pallas import tpu as pltpu


_VMEM_LIMIT_BYTES = 32 << 20          # safe on v5e/v6e (128 MiB phys) and v7x (64 MiB)
_TILE_BUDGET_BYTES = 12 << 20


# --------------------------------------------------------------------------
# Tiling helper
# --------------------------------------------------------------------------
def _round_up(x: int, m: int) -> int:
    return -(-x // m) * m


def _choose_lane_tile(L: int, in_rows: int, out_rows: int, itemsize: int,
                      budget_bytes: int = _TILE_BUDGET_BYTES) -> int:
    """Lane tile TL for a (rows, L)-blocked layout.

    TL is a multiple of 128 (or the full extent when L <= 128), sized so the
    double-buffered input block, its f32 temporary, and the double-buffered
    output block fit inside `budget_bytes` (well under the 32 MiB
    vmem_limit_bytes we request)."""
    if L <= 128:
        return L                                    # lane rule: full extent if narrow
    in_p = _round_up(max(in_rows, 1), 8)            # sublane padding
    out_p = _round_up(max(out_rows, 1), 8)
    # per-lane bytes: 2x-buffered input + f32 temp of the input + 2x-buffered output
    per_lane = in_p * (2 * itemsize + 4) + out_p * 2 * itemsize
    tl = (budget_bytes // max(per_lane, 1)) // 128 * 128
    tl = max(128, tl)
    return int(min(tl, _round_up(L, 128)))          # never bigger than padded L


# --------------------------------------------------------------------------
# Kernel 1: fused channel mean + max  (N, C, L) -> (N, 2, L)
# --------------------------------------------------------------------------
def _channel_stats_kernel(x_ref, o_ref, *, inv_c: float):
    # x block: (1, C, TL); o block: (1, 2, TL) = [mean over C, max over C]
    x = x_ref[...]
    # f32 accumulation for the sum; max stays in the native dtype (no full f32
    # copy of the block is materialized).
    mean = jnp.sum(x, axis=1, keepdims=True, dtype=jnp.float32) * inv_c
    mx = jnp.max(x, axis=1, keepdims=True)
    # Two direct slice stores instead of a concatenated temporary.
    o_ref[:, 0:1, :] = mean.astype(o_ref.dtype)
    o_ref[:, 1:2, :] = mx.astype(o_ref.dtype)


def channel_mean_max(x: jax.Array) -> jax.Array:
    """x: (N, C, H, W) -> (N, 2, H, W) with channel-mean and channel-max."""
    N, C, H, W = x.shape
    L = H * W
    x3 = x.reshape(N, C, L)
    TL = _choose_lane_tile(L, in_rows=C, out_rows=2, itemsize=x3.dtype.itemsize)
    out3 = pl.pallas_call(
        functools.partial(_channel_stats_kernel, inv_c=1.0 / C),
        out_shape=jax.ShapeDtypeStruct((N, 2, L), x.dtype),
        grid=(N, pl.cdiv(L, TL)),
        in_specs=[pl.BlockSpec((1, C, TL), lambda b, l: (b, 0, l))],
        out_specs=pl.BlockSpec((1, 2, TL), lambda b, l: (b, 0, l)),
        compiler_params=pltpu.CompilerParams(
            dimension_semantics=("parallel", "parallel"),
            vmem_limit_bytes=_VMEM_LIMIT_BYTES),
    )(x3)
    return out3.reshape(N, 2, H, W)


# --------------------------------------------------------------------------
# Kernel 2: TaylorSoftmax over the row axis of a (R, L) slab
# --------------------------------------------------------------------------
def _taylor_softmax_kernel(x_ref, o_ref, *, n: int):
    # block: (R, TL); full R extent so the reduction stays inside one block.
    # Polynomial kept in f32: v5e has no bf16 VPU and the bf16 Horner path
    # drifts past 1e-5 for |x| of a few.
    x = x_ref[...].astype(jnp.float32)
    # Horner form: fn = 1/0! + x*(1/1! + x*(1/2! + ... + x*(1/n!)))
    coeffs = [1.0 / math.factorial(i) for i in range(n, -1, -1)]
    fn = jnp.full_like(x, coeffs[0])
    for c in coeffs[1:]:
        fn = fn * x + c
    s = jnp.sum(fn, axis=0, keepdims=True)            # (1, TL) row sum, f32
    inv = pl.reciprocal(s, approx=True)               # EUP vrcp (free slot)
    inv = inv * (2.0 - s * inv)                       # one Newton-Raphson step
    o_ref[...] = (fn * inv).astype(o_ref.dtype)       # VPU multiply, not divide


def taylor_softmax(x: jax.Array, dim: int = 1, n: int = 2) -> jax.Array:
    """TaylorSoftmax over axis 1 of a 3D (B, R, W) array (lane-dense layout)."""
    assert n % 2 == 0
    assert dim == 1, "kernel is specialized for dim=1"
    assert x.ndim == 3, "taylor_softmax expects a 3D (B, R, W) input"
    B, R, W = x.shape
    # Lane-dense layout: reduction (R) on sublanes, B*W on lanes.
    xt = jnp.transpose(x, (1, 0, 2)).reshape(R, B * W)
    L = B * W
    TL = _choose_lane_tile(L, in_rows=R, out_rows=R, itemsize=xt.dtype.itemsize)
    out2 = pl.pallas_call(
        functools.partial(_taylor_softmax_kernel, n=n),
        out_shape=jax.ShapeDtypeStruct((R, L), xt.dtype),
        grid=(pl.cdiv(L, TL),),
        in_specs=[pl.BlockSpec((R, TL), lambda l: (0, l))],
        out_specs=pl.BlockSpec((R, TL), lambda l: (0, l)),
        compiler_params=pltpu.CompilerParams(
            dimension_semantics=("parallel",),
            vmem_limit_bytes=_VMEM_LIMIT_BYTES),
    )(xt)
    return out2.reshape(R, B, W).transpose(1, 0, 2)


# --------------------------------------------------------------------------
# MVASpatialAttention forward
# --------------------------------------------------------------------------
def _conv2d(x, w, padding):
    # NCHW input, OIHW weights, stride 1, no bias (matches nn.Conv2d(..., bias=False)).
    return lax.conv_general_dilated(
        x, w, window_strides=(1, 1),
        padding=((padding, padding), (padding, padding)),
        dimension_numbers=("NCHW", "OIHW", "NCHW"))


@functools.partial(jax.jit, static_argnames=("kernel_size",))
def mva_spatial_attention(front, rear, left, right, params, kernel_size=7):
    padding = 3 if kernel_size == 7 else 1
    w_front = params["conv_front"]
    w_fusion = params["conv_fusion"]

    b1 = front.shape[0]
    H, W = front.shape[2], front.shape[3]

    # Stack the four views -> one Pallas launch + one batched conv/sigmoid.
    stacked = jnp.concatenate([front, rear, left, right], axis=0)   # (4B, C, H, W)
    stats = channel_mean_max(stacked)                               # (4B, 2, H, W)

    # TODO(synk): 7x7/3x3 convolutions + sigmoid use XLA (lax.conv_general_dilated /
    # jax.nn.sigmoid) rather than custom Pallas conv kernels.
    # Original module applies conv_front to all four views — preserved.
    conv = jax.nn.sigmoid(_conv2d(stats, w_front, padding))         # (4B, 1, H, W)

    c1, h1, w1 = 1, H, W
    # (4B, 1, H, W) -> concat of the 4 views along H per batch: (B, 1, 4*H, W)
    x = (conv.reshape(4, b1, c1, h1, w1)
             .transpose(1, 2, 0, 3, 4)
             .reshape(b1, c1, 4 * h1, w1))
    x = _conv2d(x, w_fusion, 1)
    b, c, h, w = x.shape
    x = x.reshape(b, h, w)
    x = taylor_softmax(x, dim=1, n=4)                               # Pallas kernel
    front_out, rear_out, left_out, right_out = jnp.split(x, 4, axis=1)
    rs = lambda t: t.reshape(b1, c1, h1, w1)
    return rs(front_out), rs(rear_out), rs(left_out), rs(right_out)


# --------------------------------------------------------------------------
# Pure-JAX reference mirroring the PyTorch module exactly
# --------------------------------------------------------------------------
def _taylor_softmax_ref(x, dim=1, n=2):
    fn = jnp.ones_like(x)
    denor = 1.0
    for i in range(1, n + 1):
        denor *= i
        fn = fn + jnp.power(x, i) / denor
    return fn / jnp.sum(fn, axis=dim, keepdims=True)


def _mva_ref(front, rear, left, right, params, kernel_size=7):
    padding = 3 if kernel_size == 7 else 1
    w_front = params["conv_front"]
    w_fusion = params["conv_fusion"]

    def stats(t):
        return jnp.concatenate([jnp.mean(t, axis=1, keepdims=True),
                                jnp.max(t, axis=1, keepdims=True)], axis=1)

    xs = [jax.nn.sigmoid(_conv2d(stats(t), w_front, padding))
          for t in (front, rear, left, right)]
    b1, c1, h1, w1 = xs[0].shape
    x = jnp.concatenate(xs, axis=2)
    x = _conv2d(x, w_fusion, 1)
    b, c, h, w = x.shape
    x = _taylor_softmax_ref(x.reshape(b, h, w), dim=1, n=4)
    outs = jnp.split(x, 4, axis=1)
    return tuple(t.reshape(b1, c1, h1, w1) for t in outs)


if __name__ == "__main__":
    key = jax.random.PRNGKey(0)
    kf, kr, kl, kri, kwf, kwr, kwl, kwri, kwfu = jax.random.split(key, 9)
    B, C, H, W = 2, 4, 16, 16
    ks = 7

    front = jax.random.normal(kf, (B, C, H, W), jnp.float32)
    rear = jax.random.normal(kr, (B, C, H, W), jnp.float32)
    left = jax.random.normal(kl, (B, C, H, W), jnp.float32)
    right = jax.random.normal(kri, (B, C, H, W), jnp.float32)

    params = {
        "conv_front": 0.1 * jax.random.normal(kwf, (1, 2, ks, ks), jnp.float32),
        # conv_rear/left/right exist in the module but are unused by its forward.
        "conv_rear": 0.1 * jax.random.normal(kwr, (1, 2, ks, ks), jnp.float32),
        "conv_left": 0.1 * jax.random.normal(kwl, (1, 2, ks, ks), jnp.float32),
        "conv_right": 0.1 * jax.random.normal(kwri, (1, 2, ks, ks), jnp.float32),
        "conv_fusion": 0.1 * jax.random.normal(kwfu, (1, 1, 3, 3), jnp.float32),
    }

    outs = mva_spatial_attention(front, rear, left, right, params, kernel_size=ks)
    outs = jax.block_until_ready(outs)

    refs = _mva_ref(front, rear, left, right, params, kernel_size=ks)
    for o, r in zip(outs, refs):
        assert o.shape == (B, 1, H, W) and o.dtype == jnp.float32
        assert jnp.allclose(o, r, atol=1e-5, rtol=1e-5), "mismatch vs reference"

    print("KERNEL_OK")
</pallas_src>

<mosaic_0001>
module attributes {stable_mosaic.version = 11 : i64} {
  func.func @_channel_stats_kernel(%arg0: i32, %arg1: i32, %arg2: memref<1x4x256xf32, #tpu.memory_space<vmem>>, %arg3: memref<1x2x256xf32, #tpu.memory_space<vmem>>) attributes {dimension_semantics = [#tpu.dimension_semantics<parallel>, #tpu.dimension_semantics<parallel>], iteration_bounds = array<i64: 8, 1>, scalar_prefetch = 0 : i64, scratch_operands = 0 : i64, tpu.core_type = #tpu.core_type<tc>, window_params = [{transform_indices = @transform_0, window_bounds = array<i64: 1, 4, 256>}, {transform_indices = @transform_1, window_bounds = array<i64: 1, 2, 256>}]} {
    %c0 = arith.constant 0 : index
    %c0_0 = arith.constant 0 : index
    %c0_1 = arith.constant 0 : index
    %0 = vector.load %arg2[%c0, %c0_0, %c0_1] : memref<1x4x256xf32, #tpu.memory_space<vmem>>, vector<1x4x256xf32>
    %cst = arith.constant dense<0.000000e+00> : vector<1x256xf32>
    %1 = vector.multi_reduction <add>, %0, %cst [1] : vector<1x4x256xf32> to vector<1x256xf32>
    %2 = vector.shape_cast %1 : vector<1x256xf32> to vector<1x1x256xf32>
    %cst_2 = arith.constant 2.500000e-01 : f32
    %3 = vector.broadcast %cst_2 : f32 to vector<1x1x256xf32>
    %4 = arith.mulf %2, %3 : vector<1x1x256xf32>
    %cst_3 = arith.constant dense<0xFF800000> : vector<1x256xf32>
    %5 = vector.multi_reduction <maximumf>, %0, %cst_3 [1] : vector<1x4x256xf32> to vector<1x256xf32>
    %6 = vector.shape_cast %5 : vector<1x256xf32> to vector<1x1x256xf32>
    %c0_4 = arith.constant 0 : index
    %c0_5 = arith.constant 0 : index
    %c0_6 = arith.constant 0 : index
    %7 = vector.load %arg3[%c0_4, %c0_5, %c0_6] : memref<1x2x256xf32, #tpu.memory_space<vmem>>, vector<1x1x256xf32>
    tpu.vector_store %arg3[%c0_4, %c0_5, %c0_6], %4 {strides = array<i32>} : memref<1x2x256xf32, #tpu.memory_space<vmem>>, vector<1x1x256xf32>,
    %c0_7 = arith.constant 0 : index
    %c1 = arith.constant 1 : index
    %c0_8 = arith.constant 0 : index
    %8 = vector.load %arg3[%c0_7, %c1, %c0_8] : memref<1x2x256xf32, #tpu.memory_space<vmem>>, vector<1x1x256xf32>
    tpu.vector_store %arg3[%c0_7, %c1, %c0_8], %6 {strides = array<i32>} : memref<1x2x256xf32, #tpu.memory_space<vmem>>, vector<1x1x256xf32>,
    return
  }
  func.func @transform_0(%arg0: i32, %arg1: i32) -> (i32, i32, i32) {
    %c0_i32 = arith.constant 0 : i32
    %c0_i32_0 = arith.constant 0 : i32
    return %arg0, %c0_i32, %arg1 : i32, i32, i32
  }
  func.func @transform_1(%arg0: i32, %arg1: i32) -> (i32, i32, i32) {
    %c0_i32 = arith.constant 0 : i32
    %c0_i32_0 = arith.constant 0 : i32
    return %arg0, %c0_i32, %arg1 : i32, i32, i32
  }
}

module attributes {stable_mosaic.version = 11 : i64} {
  func.func @_taylor_softmax_kernel(%arg0: i32, %arg1: memref<64x32xf32, #tpu.memory_space<vmem>>, %arg2: memref<64x32xf32, #tpu.memory_space<vmem>>) attributes {dimension_semantics = [#tpu.dimension_semantics<parallel>], iteration_bounds = array<i64: 1>, scalar_prefetch = 0 : i64, scratch_operands = 0 : i64, tpu.core_type = #tpu.core_type<tc>, window_params = [{transform_indices = @transform_0, window_bounds = array<i64: 64, 32>}, {transform_indices = @transform_1, window_bounds = array<i64: 64, 32>}]} {
    %c0 = arith.constant 0 : index
    %c0_0 = arith.constant 0 : index
    %0 = vector.load %arg1[%c0, %c0_0] : memref<64x32xf32, #tpu.memory_space<vmem>>, vector<64x32xf32>
    %cst = arith.constant 0.0416666679 : f32
    %1 = vector.broadcast %cst : f32 to vector<64x32xf32>
    %2 = arith.mulf %1, %0 : vector<64x32xf32>
    %cst_1 = arith.constant 0.166666672 : f32
    %3 = vector.broadcast %cst_1 : f32 to vector<64x32xf32>
    %4 = arith.addf %2, %3 : vector<64x32xf32>
    %5 = arith.mulf %4, %0 : vector<64x32xf32>
    %cst_2 = arith.constant 5.000000e-01 : f32
    %6 = vector.broadcast %cst_2 : f32 to vector<64x32xf32>
    %7 = arith.addf %5, %6 : vector<64x32xf32>
    %8 = arith.mulf %7, %0 : vector<64x32xf32>
    %cst_3 = arith.constant 1.000000e+00 : f32
    %9 = vector.broadcast %cst_3 : f32 to vector<64x32xf32>
    %10 = arith.addf %8, %9 : vector<64x32xf32>
    %11 = arith.mulf %10, %0 : vector<64x32xf32>
    %cst_4 = arith.constant 1.000000e+00 : f32
    %12 = vector.broadcast %cst_4 : f32 to vector<64x32xf32>
    %13 = arith.addf %11, %12 : vector<64x32xf32>
    %cst_5 = arith.constant dense<0.000000e+00> : vector<32xf32>
    %14 = vector.multi_reduction <add>, %13, %cst_5 [0] : vector<64x32xf32> to vector<32xf32>
    %15 = vector.shape_cast %14 : vector<32xf32> to vector<1x32xf32>
    %16 = tpu.reciprocal %15 {approx = true} : vector<1x32xf32> -> vector<1x32xf32>
    %17 = arith.mulf %15, %16 : vector<1x32xf32>
    %cst_6 = arith.constant 2.000000e+00 : f32
    %18 = vector.broadcast %cst_6 : f32 to vector<1x32xf32>
    %19 = arith.subf %18, %17 : vector<1x32xf32>
    %20 = arith.mulf %16, %19 : vector<1x32xf32>
    %21 = vector.broadcast %20 : vector<1x32xf32> to vector<64x32xf32>
    %22 = arith.mulf %13, %21 : vector<64x32xf32>
    %c0_7 = arith.constant 0 : index
    %c0_8 = arith.constant 0 : index
    %23 = vector.load %arg2[%c0_7, %c0_8] : memref<64x32xf32, #tpu.memory_space<vmem>>, vector<64x32xf32>
    tpu.vector_store %arg2[%c0_7, %c0_8], %22 {strides = array<i32>} : memref<64x32xf32, #tpu.memory_space<vmem>>, vector<64x32xf32>,
    return
  }
  func.func @transform_0(%arg0: i32) -> (i32, i32) {
    %c0_i32 = arith.constant 0 : i32
    %c0_i32_0 = arith.constant 0 : i32
    return %c0_i32, %arg0 : i32, i32
  }
  func.func @transform_1(%arg0: i32) -> (i32, i32) {
    %c0_i32 = arith.constant 0 : i32
    %c0_i32_0 = arith.constant 0 : i32
    return %c0_i32, %arg0 : i32, i32
  }
}

</mosaic_0001>

<llo_original>
// kernel: mva_spatial_attention.2
$region0: #{mva_spatial_attention.2}
  #allocation0 [shape = 'u32[]', space=smem, size = 0x4, offset = 0x4, fixed_abs, tag = 'smem constant byte address 0x4 - core index']
  #allocation1 [shape = 'u32[144,128]{1,0:T(1,128)}', space=vmem, size = 0x12000, scoped, tag = 'internal scratch']
  %s0 = inlined_call_operand.vmem [shape: f32[8,4,256], index: 0, kind: input, shape index: {}]
  %s1 = inlined_call_operand.vmem [shape: f32[8,2,256], index: 1, kind: output, shape index: {}]
  %s2 = sld [smem:[#allocation0]]
  $region37: #{mva_spatial_attention.2} parent=0
    _
  %s4 = ssub.s32 1, %s2
  %s5 = scalar_select 0, %s4, %s2
  loop: start=0, step=1, limit=10
  $region2: #{mva_spatial_attention.2} parent=0 // loop_pre_header
    _
  $region3: #{mva_spatial_attention.2} parent=0 // loop_header
    %s7 = sphi 0, %s11
    %p8 = scmp.ge.s32.totalorder %s7, 10
    %s14 = sphi 0, %s26
    %s15 = sphi 0, %s22
    %s16 = sphi 0, %s14
    %s17 = sphi 0, %s15
    %s18 = sphi 0, %s16
    %s19 = sphi 0, %s17
    %s31 = sphi 0, %s33
    %s34 = sphi 0, %s31
    %s35 = sphi 0, %s34
    %s51 = sphi 0, %s35
    %s59 = sphi 0, %s61
    %s62 = sphi 0, %s59
    %s63 = sphi 0, %s62
    %s79 = sphi 0, %s63
  $region4: #{mva_spatial_attention.2} parent=0 // loop_header_branch
    %10 = sbr.rel (%p8) target = $region8
  $region5: #{mva_spatial_attention.2} parent=0 // loop_body
    %s12 = ssub.s32 %s7, 1
    %s13 = ssub.s32 %s7, 2
    %s20 = sadd.s32 1, %s15
    %p21 = scmp.ge.s32.totalorder %s20, 1
    %s22 = scalar_select %p21, 0, %s20
    %s23 = sadd.s32 1, %s14
    %s24 = scalar_select %p21, %s23, %s14
    %p25 = scmp.ge.s32.totalorder %s24, 8
    %s26 = scalar_select %p25, 0, %s24
    %s27 = ssub.s32 %s14, %s26
    %s28 = ssub.s32 %s15, %s22
    %s29 = sor.u32 %s27, %s28
    %p30 = scmp.eq.s32.totalorder %s29, 0
    %s32 = sadd.s32 %s31, 1
    %s33 = scalar_select %p30, %s31, %s32
    %p36 = pneg %p30
    %p37 = scmp.eq.s32.totalorder %s7, 7
    %p38 = por %p36, %p37
    %p39 = scmp.ne.s32.totalorder %s31, %s34
    %p40 = scmp.eq.s32.totalorder %s7, 0
    %p41 = por %p39, %p40
    %p42 = scmp.ne.s32.totalorder %s31, %s34
    %p43 = scmp.eq.s32.totalorder %s12, 7
    %p44 = por %p42, %p43
    %p45 = scmp.ne.s32.totalorder %s34, %s35
    %p46 = scmp.eq.s32.totalorder %s12, 0
    %p47 = por %p45, %p46
    %p48 = scmp.ne.s32.totalorder %s34, %s35
    %p49 = scmp.eq.s32.totalorder %s13, 7
    %p50 = por %p48, %p49
    %p52 = scmp.ne.s32.totalorder %s35, %s51
    %p53 = scmp.eq.s32.totalorder %s13, 0
    %p54 = por %p52, %p53
    %s55 = ssub.s32 %s14, %s26
    %s56 = ssub.s32 %s15, %s22
    %s57 = sor.u32 %s55, %s56
    %p58 = scmp.eq.s32.totalorder %s57, 0
    %s60 = sadd.s32 %s59, 1
    %s61 = scalar_select %p58, %s59, %s60
    %p64 = pneg %p58
    %p65 = scmp.eq.s32.totalorder %s7, 7
    %p66 = por %p64, %p65
    %p67 = scmp.ne.s32.totalorder %s59, %s62
    %p68 = scmp.eq.s32.totalorder %s7, 0
    %p69 = por %p67, %p68
    %p70 = scmp.ne.s32.totalorder %s59, %s62
    %p71 = scmp.eq.s32.totalorder %s12, 7
    %p72 = por %p70, %p71
    %p73 = scmp.ne.s32.totalorder %s62, %s63
    %p74 = scmp.eq.s32.totalorder %s12, 0
    %p75 = por %p73, %p74
    %p76 = scmp.ne.s32.totalorder %s62, %s63
    %p77 = scmp.eq.s32.totalorder %s13, 7
    %p78 = por %p76, %p77
    %p80 = scmp.ne.s32.totalorder %s63, %s79
    %p81 = scmp.eq.s32.totalorder %s13, 0
    %p82 = por %p80, %p81
    %p83 = scmp.le.s32.totalorder 1, %s7
    %p84 = scmp.lt.s32.totalorder %s7, 9
    %p85 = pnand %p83, %p84
    %p86 = pneg %p85
    // Predicated region
    $region9: #{mva_spatial_attention.2} parent=5 // pred_check
      _
    $region10: #{mva_spatial_attention.2} parent=5 // pred_check_branch
      %88 = sbr.rel (%p85) target = $region12
    $region11: #{mva_spatial_attention.2} parent=5 // pred_region
      %s89 = ssub.s32 %s7, 1
    $region12: #{mva_spatial_attention.2} parent=5 // pred_fallthru
      _
    %p90 = scmp.lt.s32.totalorder %s7, 8
    // Predicated region
    $region13: #{mva_spatial_attention.2} parent=5 // pred_check
      %p91 = pneg %p90
    $region14: #{mva_spatial_attention.2} parent=5 // pred_check_branch
      %93 = sbr.rel (%p91) target = $region16
    $region15: #{mva_spatial_attention.2} parent=5 // pred_region
      // Predicated region
      $region17: #{mva_spatial_attention.2} parent=15 // pred_check
        %p94 = pneg %p41
      $region18: #{mva_spatial_attention.2} parent=15 // pred_check_branch
        %96 = sbr.rel (%p94) target = $region20
      $region19: #{mva_spatial_attention.2} parent=15 // pred_region
        %s97 = smul.u32 2, %s15
        %p98 = scmp.lt.s32.totalorder %s14, 7
        %s99 = scalar_select %p98, %s14, 7
        %p100 = scmp.lt.s32.totalorder %s97, 1
        %s101 = scalar_select %p100, %s97, 1
        %s102 = smul.addr %s99, 2
        %s103 = sadd.s32 %s101, %s102
        %s104 = smul.addr %s103, 4
        %s105 = scalar_lea.vmem %s0, %s104
        %s106 = smul.u32 2, %s15
      $region20: #{mva_spatial_attention.2} parent=15 // pred_fallthru
        _
    $region16: #{mva_spatial_attention.2} parent=5 // pred_fallthru
      _
    %p107 = scmp.le.s32.totalorder 1, %s7
    %p108 = scmp.lt.s32.totalorder %s7, 9
    %p109 = pnand %p107, %p108
    %p110 = pneg %p109
    // Predicated region
    $region21: #{mva_spatial_attention.2} parent=5 // pred_check
      _
    $region22: #{mva_spatial_attention.2} parent=5 // pred_check_branch
      %112 = sbr.rel (%p109) target = $region24
    $region23: #{mva_spatial_attention.2} parent=5 // pred_region
      %s113 = ssub.s32 %s7, 1
      %s114 = smul.u32 2, %s17
      %p115 = scmp.lt.s32.totalorder %s16, 7
      %s116 = scalar_select %p115, %s16, 7
      %p117 = scmp.lt.s32.totalorder %s114, 1
      %s118 = scalar_select %p117, %s114, 1
      %s119 = smul.addr %s116, 2
      %s120 = sadd.s32 %s118, %s119
      %s121 = smul.addr %s120, 4
      %s122 = scalar_lea.vmem %s0, %s121
      %p123 = pneg %p47
      %p124 = pneg %p44
      %p125 = pneg %p75
      %p126 = pneg %p72
      %s127 = smul.u32 2, %s17
      %p128 = scmp.lt.s32.totalorder %s16, 7
      %s129 = scalar_select %p128, %s16, 7
      %p130 = scmp.lt.s32.totalorder %s127, 1
      %s131 = scalar_select %p130, %s127, 1
      %s132 = smul.addr %s129, 2
      %s133 = sadd.s32 %s131, %s132
      %s134 = smul.addr %s133, 2
      %s135 = scalar_lea.vmem %s1, %s134
      %s136 = smul.u32 2, %s17
      %p137 = scmp.lt.s32.totalorder %s16, 7
      %s138 = scalar_select %p137, %s16, 7
      %p139 = scmp.lt.s32.totalorder %s136, 1
      %s140 = scalar_select %p139, %s136, 1
      %s141 = smul.addr %s138, 2
      %s142 = sadd.s32 %s140, %s141
      %s143 = smul.addr %s142, 4
      %s144 = scalar_lea.vmem %s0, %s143
      %s145 = smul.u32 2, %s17
      %s146 = smul.u32 2, %s17
      %p147 = scmp.lt.s32.totalorder %s16, 7
      %s148 = scalar_select %p147, %s16, 7
      %p149 = scmp.lt.s32.totalorder %s146, 1
      %s150 = scalar_select %p149, %s146, 1
      %s151 = smul.addr %s148, 2
      %s152 = sadd.s32 %s150, %s151
      %s153 = smul.addr %s152, 2
      %s154 = scalar_lea.vmem %s1, %s153
      %s155 = smul.u32 2, %s17
      %v156 = vld [vmem:[%s144] sm:$0xff]
      %v158 = vcombine.high %v156, %v156
      %vm160 = vcmask 1043456
      %v161 = vsel %vm160, %v156, 0.0
      %v162 = vrot.slane %v161, 4
      %v163 = vadd.f32 %v161, %v162
      %v164 = vrot.slane %v163, 2
      %v165 = vadd.f32 %v163, %v164
      %v166 = vrot.slane %v165, 1
      %v167 = vadd.f32 %v165, %v166
      %v168 = vsel %vm160, %v158, 0.0
      %v169 = vrot.slane %v168, 4
      %v170 = vadd.f32 %v168, %v169
      %v171 = vrot.slane %v170, 2
      %v172 = vadd.f32 %v170, %v171
      %v173 = vrot.slane %v172, 1
      %v174 = vadd.f32 %v172, %v173
      %v175 = vmul.f32 %v167, 0.25
      %v176 = vmul.f32 %v174, 0.25
      %v177 = vsel %vm160, %v156, -inf
      %v178 = vrot.slane %v177, 4
      %v179 = vmax.f32 %v177, %v178
      %v180 = vrot.slane %v179, 2
      %v181 = vmax.f32 %v179, %v180
      %v182 = vrot.slane %v181, 1
      %v183 = vmax.f32 %v181, %v182
      %v184 = vsel %vm160, %v158, -inf
      %v185 = vrot.slane %v184, 4
      %v186 = vmax.f32 %v184, %v185
      %v187 = vrot.slane %v186, 2
      %v188 = vmax.f32 %v186, %v187
      %v189 = vrot.slane %v188, 1
      %v190 = vmax.f32 %v188, %v189
      %v193 = vcombine.low %v175, %v176
      %v195 = vunpack.c.l.s4 1966171168
      %v196 = vunpack.c.0.s8 %v195
      %v197 = vlaneseq
      %v198 = vshrl.u32 %v197, 7
      %v199 = vsub.s32 %v196, %v198
      %v200 = vrot.slane %v193, %v199
      %v202 = vunpack.c.l.s4 1966171168
      %v203 = vunpack.c.0.s8 %v202
      %v204 = vlaneseq
      %v205 = vshrl.u32 %v204, 7
      %v206 = vsub.s32 %v203, %v205
      %v207 = vrot.slane %v200, %v206
      %v209 = vlaneseq
      %vm210 = vcmp.ge.s32.totalorder %v209, 0
      %vm211 = vcmp.lt.s32.totalorder %v209, 256
      %vm212 = vmand %vm210, %vm211
      %213 = vst.msk [vmem:[%s154] ss:$2 sm:$0x3] %vm212, %v207
      %v216 = vcombine.low %v183, %v190
      %v218 = vunpack.c.l.s4 1966171168
      %v219 = vunpack.c.0.s8 %v218
      %v220 = vlaneseq
      %v221 = vshrl.u32 %v220, 7
      %v222 = vsub.s32 %v219, %v221
      %v223 = vrot.slane %v216, %v222
      %v225 = vunpack.c.l.s4 1966171168
      %v226 = vunpack.c.0.s8 %v225
      %v227 = vlaneseq
      %v228 = vshrl.u32 %v227, 7
      %v229 = vsub.s32 %v226, %v228
      %v230 = vrot.slane %v223, %v229
      %s232 = scalar_lea.vmem %s154, 1
      %233 = vst.msk [vmem:[%s232] ss:$2 sm:$0x3] %vm212, %v230
      %s234 = smul.u32 2, %s17
      %p235 = scmp.lt.s32.totalorder %s16, 7
      %s236 = scalar_select %p235, %s16, 7
      %p237 = scmp.lt.s32.totalorder %s234, 1
      %s238 = scalar_select %p237, %s234, 1
      %s239 = smul.addr %s236, 2
      %s240 = sadd.s32 %s238, %s239
      %s241 = smul.addr %s240, 2
      %s242 = scalar_lea.vmem %s1, %s241
      // Predicated region
      $region25: #{mva_spatial_attention.2} parent=23 // pred_check
        %p243 = pneg %p72
      $region26: #{mva_spatial_attention.2} parent=23 // pred_check_branch
        %245 = sbr.rel (%p243) target = $region28
      $region27: #{mva_spatial_attention.2} parent=23 // pred_region
        %s246 = smul.u32 2, %s17
      $region28: #{mva_spatial_attention.2} parent=23 // pred_fallthru
        _
    $region24: #{mva_spatial_attention.2} parent=5 // pred_fallthru
      _
    %p247 = scmp.le.s32.totalorder 2, %s7
    // Predicated region
    $region29: #{mva_spatial_attention.2} parent=5 // pred_check
      %p248 = pneg %p247
    $region30: #{mva_spatial_attention.2} parent=5 // pred_check_branch
      %250 = sbr.rel (%p248) target = $region32
    $region31: #{mva_spatial_attention.2} parent=5 // pred_region
      %s251 = ssub.s32 %s7, 2
      // Predicated region
      $region33: #{mva_spatial_attention.2} parent=31 // pred_check
        %p252 = pneg %p78
      $region34: #{mva_spatial_attention.2} parent=31 // pred_check_branch
        %254 = sbr.rel (%p252) target = $region36
      $region35: #{mva_spatial_attention.2} parent=31 // pred_region
        %s255 = smul.u32 2, %s19
        %p256 = scmp.lt.s32.totalorder %s18, 7
        %s257 = scalar_select %p256, %s18, 7
        %p258 = scmp.lt.s32.totalorder %s255, 1
        %s259 = scalar_select %p258, %s255, 1
        %s260 = smul.addr %s257, 2
        %s261 = sadd.s32 %s259, %s260
        %s262 = smul.addr %s261, 2
        %s263 = scalar_lea.vmem %s1, %s262
      $region36: #{mva_spatial_attention.2} parent=31 // pred_fallthru
        _
    $region32: #{mva_spatial_attention.2} parent=5 // pred_fallthru
      _
  $region6: #{mva_spatial_attention.2} parent=0 // loop_footer
    %s11 = sadd.s32 1, %s7
  $region7: #{mva_spatial_attention.2} parent=0 // loop_footer_branch
    %6 = sbr.rel target = $region3
  $region8: #{mva_spatial_attention.2} parent=0 // loop_exit
    _

// kernel: mva_spatial_attention.3
$region0: #{mva_spatial_attention.3}
  #allocation0 [shape = 'u32[]', space=smem, size = 0x4, offset = 0x4, fixed_abs, tag = 'smem constant byte address 0x4 - core index']
  #allocation1 [shape = 'u32[144,128]{1,0:T(1,128)}', space=vmem, size = 0x12000, scoped, tag = 'internal scratch']
  %s0 = inlined_call_operand.vmem [shape: f32[64,32], index: 0, kind: input, shape index: {}]
  %s1 = inlined_call_operand.vmem [shape: f32[64,32], index: 1, kind: output, shape index: {}]
  %s2 = sld [smem:[#allocation0]]
  $region14: #{mva_spatial_attention.3} parent=0
    _
  %s4 = ssub.s32 1, %s2
  %s5 = scalar_select 0, %s4, %s2
  // Predicated region
  $region2: #{mva_spatial_attention.3} parent=0 // pred_check
    _
  $region3: #{mva_spatial_attention.3} parent=0 // pred_check_branch
    %7 = sbr.rel (0) target = $region5
  $region4: #{mva_spatial_attention.3} parent=0 // pred_region
    _
  $region5: #{mva_spatial_attention.3} parent=0 // pred_fallthru
    _
  %v8 = vld [vmem:[%s0] sm:$0xff]
  %v9 = vld [vmem:[%s0 + $0x8] sm:$0xff]
  %v10 = vld [vmem:[%s0 + $0x10] sm:$0xff]
  %v11 = vld [vmem:[%s0 + $0x18] sm:$0xff]
  %v12 = vld [vmem:[%s0 + $0x20] sm:$0xff]
  %v13 = vld [vmem:[%s0 + $0x28] sm:$0xff]
  %v14 = vld [vmem:[%s0 + $0x30] sm:$0xff]
  %v15 = vld [vmem:[%s0 + $0x38] sm:$0xff]
  %v16 = vmul.f32 %v8, 0.041666668
  %v17 = vmul.f32 %v9, 0.041666668
  %v18 = vmul.f32 %v10, 0.041666668
  %v19 = vmul.f32 %v11, 0.041666668
  %v20 = vmul.f32 %v12, 0.041666668
  %v21 = vmul.f32 %v13, 0.041666668
  %v22 = vmul.f32 %v14, 0.041666668
  %v23 = vmul.f32 %v15, 0.041666668
  %v24 = vadd.f32 %v16, 0.16666667
  %v25 = vadd.f32 %v17, 0.16666667
  %v26 = vadd.f32 %v18, 0.16666667
  %v27 = vadd.f32 %v19, 0.16666667
  %v28 = vadd.f32 %v20, 0.16666667
  %v29 = vadd.f32 %v21, 0.16666667
  %v30 = vadd.f32 %v22, 0.16666667
  %v31 = vadd.f32 %v23, 0.16666667
  %v32 = vmul.f32 %v24, %v8
  %v33 = vmul.f32 %v25, %v9
  %v34 = vmul.f32 %v26, %v10
  %v35 = vmul.f32 %v27, %v11
  %v36 = vmul.f32 %v28, %v12
  %v37 = vmul.f32 %v29, %v13
  %v38 = vmul.f32 %v30, %v14
  %v39 = vmul.f32 %v31, %v15
  %v40 = vadd.f32 %v32, 0.5
  %v41 = vadd.f32 %v33, 0.5
  %v42 = vadd.f32 %v34, 0.5
  %v43 = vadd.f32 %v35, 0.5
  %v44 = vadd.f32 %v36, 0.5
  %v45 = vadd.f32 %v37, 0.5
  %v46 = vadd.f32 %v38, 0.5
  %v47 = vadd.f32 %v39, 0.5
  %v48 = vmul.f32 %v40, %v8
  %v49 = vmul.f32 %v41, %v9
  %v50 = vmul.f32 %v42, %v10
  %v51 = vmul.f32 %v43, %v11
  %v52 = vmul.f32 %v44, %v12
  %v53 = vmul.f32 %v45, %v13
  %v54 = vmul.f32 %v46, %v14
  %v55 = vmul.f32 %v47, %v15
  %v56 = vadd.f32 %v48, 1.0
  %v57 = vadd.f32 %v49, 1.0
  %v58 = vadd.f32 %v50, 1.0
  %v59 = vadd.f32 %v51, 1.0
  %v60 = vadd.f32 %v52, 1.0
  %v61 = vadd.f32 %v53, 1.0
  %v62 = vadd.f32 %v54, 1.0
  %v63 = vadd.f32 %v55, 1.0
  %v64 = vmul.f32 %v56, %v8
  %v65 = vmul.f32 %v57, %v9
  %v66 = vmul.f32 %v58, %v10
  %v67 = vmul.f32 %v59, %v11
  %v68 = vmul.f32 %v60, %v12
  %v69 = vmul.f32 %v61, %v13
  %v70 = vmul.f32 %v62, %v14
  %v71 = vmul.f32 %v63, %v15
  %v72 = vadd.f32 %v64, 1.0
  %v73 = vadd.f32 %v65, 1.0
  %v74 = vadd.f32 %v66, 1.0
  %v75 = vadd.f32 %v67, 1.0
  %v76 = vadd.f32 %v68, 1.0
  %v77 = vadd.f32 %v69, 1.0
  %v78 = vadd.f32 %v70, 1.0
  %v79 = vadd.f32 %v71, 1.0
  %vm80 = vcmask 261120
  %v81 = vsel %vm80, %v72, 0.0
  %v82 = vsel %vm80, %v73, 0.0
  %v83 = vadd.f32 %v81, %v82
  %v84 = vsel %vm80, %v74, 0.0
  %v85 = vadd.f32 %v83, %v84
  %v86 = vsel %vm80, %v75, 0.0
  %v87 = vadd.f32 %v85, %v86
  %v88 = vsel %vm80, %v76, 0.0
  %v89 = vadd.f32 %v87, %v88
  %v90 = vsel %vm80, %v77, 0.0
  %v91 = vadd.f32 %v89, %v90
  %v92 = vsel %vm80, %v78, 0.0
  %v93 = vadd.f32 %v91, %v92
  %v94 = vsel %vm80, %v79, 0.0
  %v95 = vadd.f32 %v93, %v94
  %v96 = vrot.slane %v95, 4
  %v97 = vadd.f32 %v95, %v96
  %v98 = vrot.slane %v97, 2
  %v99 = vadd.f32 %v97, %v98
  %v100 = vrot.slane %v99, 1
  %v101 = vadd.f32 %v99, %v100
  %v102 = vrcp.pop %v101
  %v103 = vmul.f32 %v101, %v102
  %v104 = vsub.f32 2.0, %v103
  %v105 = vmul.f32 %v102, %v104
  %v106 = vmul.f32 %v72, %v105
  %v107 = vmul.f32 %v73, %v105
  %v108 = vmul.f32 %v74, %v105
  %v109 = vmul.f32 %v75, %v105
  %v110 = vmul.f32 %v76, %v105
  %v111 = vmul.f32 %v77, %v105
  %v112 = vmul.f32 %v78, %v105
  %v113 = vmul.f32 %v79, %v105
  %114 = vst.msk [vmem:[%s1] sm:$0xff] %vm80, %v106
  %115 = vst.msk [vmem:[%s1 + $0x8] sm:$0xff] %vm80, %v107
  %116 = vst.msk [vmem:[%s1 + $0x10] sm:$0xff] %vm80, %v108
  %117 = vst.msk [vmem:[%s1 + $0x18] sm:$0xff] %vm80, %v109
  %118 = vst.msk [vmem:[%s1 + $0x20] sm:$0xff] %vm80, %v110
  %119 = vst.msk [vmem:[%s1 + $0x28] sm:$0xff] %vm80, %v111
  %120 = vst.msk [vmem:[%s1 + $0x30] sm:$0xff] %vm80, %v112
  %121 = vst.msk [vmem:[%s1 + $0x38] sm:$0xff] %vm80, %v113
  // Predicated region
  $region6: #{mva_spatial_attention.3} parent=0 // pred_check
    _
  $region7: #{mva_spatial_attention.3} parent=0 // pred_check_branch
    %123 = sbr.rel (0) target = $region9
  $region8: #{mva_spatial_attention.3} parent=0 // pred_region
    _
  $region9: #{mva_spatial_attention.3} parent=0 // pred_fallthru
    _
  // Predicated region
  $region10: #{mva_spatial_attention.3} parent=0 // pred_check
    _
  $region11: #{mva_spatial_attention.3} parent=0 // pred_check_branch
    %125 = sbr.rel (0) target = $region13
  $region12: #{mva_spatial_attention.3} parent=0 // pred_region
    _
  $region13: #{mva_spatial_attention.3} parent=0 // pred_fallthru
    _

</llo_original>
